<compile_context>
chip_gen: v6e
topology: v6e:2x2x1
jax: 0.10.0
libtpu: 0.0.40
codegen_flags: <defaults>
</compile_context>

<pallas_src>
import jax
import jax.numpy as jnp
import numpy as np
from jax.experimental import pallas as pl
from jax.experimental.pallas import tpu as pltpu

LANE = 128


def _round_up(n, m):
    return ((n + m - 1) // m) * m


def _compute_pads_and_dilations(filter_widths):
    pads = [filter_widths[0] // 2]
    dils = []
    nd = filter_widths[0]
    for i in range(1, len(filter_widths)):
        pads.append((filter_widths[i] - 1) * nd // 2)
        dils.append(nd)
        nd *= filter_widths[i]
    return pads, dils


# ----------------------------------------------------------------------------
# Fused whole-network Pallas kernel
# ----------------------------------------------------------------------------
def _make_fused_kernel(layer_meta, T_pad):
    """layer_meta: tuple of (K, dilation, pad) per residual block."""
    L = len(layer_meta)

    def shift_left(x, amount):
        # result[:, t] = x[:, t + amount]  (valid prefix; wrap-around is garbage
        # columns only).  XLU lane rotation, no lane-slice relayouts.
        amount = amount % T_pad
        if amount == 0:
            return x
        return pltpu.roll(x, T_pad - amount, 1)

    def stacked_taps(x_f32, K, d):
        # Build the (K*C, T_pad) im2col RHS for a dilated width-K conv.
        if K == 1:
            return x_f32.astype(jnp.bfloat16)
        taps = [shift_left(x_f32, k * d) for k in range(K)]
        return jnp.concatenate(taps, axis=0).astype(jnp.bfloat16)

    def mm(w_ref, rhs_bf16):
        # bf16 x bf16 -> f32 accumulate on the MXU.
        return jnp.dot(w_ref[...], rhs_bf16, preferred_element_type=jnp.float32)

    def sigmoid(y):
        # exp on EUP, approx reciprocal on EUP -> keeps the epilogue off VALU.
        return pl.reciprocal(1.0 + jnp.exp(-y), approx=True)

    def kernel(*refs):
        it = iter(refs)
        xy_ref = next(it)      # (1, K0*2J, T_pad) f32  (taps pre-stacked)
        scr_ref = next(it)     # (1, K0*J,  T_pad) f32
        ew_ref = next(it)      # (C, K0*2J) bf16   (BN scale folded in)
        eb_ref = next(it)      # (C, 1)     f32
        ecw_ref = next(it)     # (C, K0*J)  bf16
        ecb_ref = next(it)     # (C, 1)     f32
        layer_refs = []
        for _ in range(L):
            layer_refs.append(tuple(next(it) for _ in range(6)))
        sw_ref = next(it)      # (3*Jout, C) bf16
        sb_ref = next(it)      # (3*Jout, 1) f32
        out_ref = next(it)     # (1, 3*Jout, T_pad) f32

        # --- expand convs (single matmul each, BN folded) ---
        xs = jnp.maximum(mm(ew_ref, xy_ref[0].astype(jnp.bfloat16)) + eb_ref[...], 0.0)
        ss = sigmoid(mm(ecw_ref, scr_ref[0].astype(jnp.bfloat16)) + ecb_ref[...])
        xs = xs * (1.0 + ss)                       # x = x + x*scr (fused gate)

        # --- residual blocks (activations stay resident) ---
        for (K, d, pad), (w1, b1, wc, bc, w2, b2) in zip(layer_meta, layer_refs):
            g = xs * (1.0 + ss)                    # gate again (matches reference)
            x_mid = jnp.maximum(mm(w1, stacked_taps(g, K, d)) + b1[...], 0.0)
            ss = sigmoid(mm(wc, stacked_taps(ss, K, d)) + bc[...])
            branch = jnp.maximum(mm(w2, x_mid.astype(jnp.bfloat16)) + b2[...], 0.0)
            xs = shift_left(xs, pad) + branch      # time-aligned residual add

        # --- shrink (1x1 conv with bias) ---
        out_ref[0] = mm(sw_ref, xs.astype(jnp.bfloat16)) + sb_ref[...]

    return kernel


# ----------------------------------------------------------------------------
# Wrapper: weight folding / im2col of the input / pallas_call
# ----------------------------------------------------------------------------
def conf_temporal_model_v32_forward(x, params, filter_widths, j_out):
    B, T, J, F = x.shape
    K0 = filter_widths[0]
    pads, _ = _compute_pads_and_dilations(filter_widths)
    rf = 1 + 2 * sum(pads)
    T_final = T - (rf - 1)
    T_pad = _round_up(T, LANE)

    scr = jnp.transpose(x[..., -1], (0, 2, 1)).astype(jnp.float32)            # (B, J, T)
    xy = jnp.transpose(x[..., :-1].reshape(B, T, J * (F - 1)), (0, 2, 1))     # (B, 2J, T)
    xy = xy.astype(jnp.float32)

    padw = T_pad - T
    scr = jnp.pad(scr, ((0, 0), (0, 0), (0, padw)))
    xy = jnp.pad(xy, ((0, 0), (0, 0), (0, padw)))

    # im2col of the network input in the wrapper so the expand convs are single
    # lane-dense MXU matmuls inside the kernel.
    def stack_input_taps(a, K):
        return jnp.concatenate([jnp.roll(a, -k, axis=-1) for k in range(K)], axis=1)

    xy_taps = stack_input_taps(xy, K0)            # (B, K0*2J, T_pad)
    scr_taps = stack_input_taps(scr, K0)          # (B, K0*J,  T_pad)

    def fold(w, scale):
        # (K, C_out, C_in) conv weight * per-channel BN scale -> (C_out, K*C_in) bf16
        K_, Co, Ci = w.shape
        wf = w * scale.reshape(1, Co, 1)
        return jnp.transpose(wf, (1, 0, 2)).reshape(Co, K_ * Ci).astype(jnp.bfloat16)

    weights = [
        fold(params["expand_w"], params["expand_bn"][0]), params["expand_bn"][1],
        fold(params["expand_conf_w"], params["expand_bn_conf"][0]), params["expand_bn_conf"][1],
    ]
    layer_meta = []
    for i, layer in enumerate(params["layers"]):
        layer_meta.append((filter_widths[i + 1], layer["dilation"], pads[i + 1]))
        weights += [
            fold(layer["w1"], layer["bn1"][0]), layer["bn1"][1],
            fold(layer["w_conf"], layer["bn_conf"][0]), layer["bn_conf"][1],
            fold(layer["w2"], layer["bn2"][0]), layer["bn2"][1],
        ]
    c_out = 3 * j_out
    weights += [params["shrink_w"][0].astype(jnp.bfloat16), params["shrink_b"]]

    kernel = _make_fused_kernel(tuple(layer_meta), T_pad)

    def batch_spec(arr):
        nd = arr.ndim
        return pl.BlockSpec((1,) + arr.shape[1:], lambda b, _nd=nd: (b,) + (0,) * (_nd - 1))

    def full_spec(arr):
        nd = arr.ndim
        return pl.BlockSpec(arr.shape, lambda b, _nd=nd: (0,) * _nd)

    in_specs = [batch_spec(xy_taps), batch_spec(scr_taps)] + [full_spec(w) for w in weights]

    out = pl.pallas_call(
        kernel,
        out_shape=jax.ShapeDtypeStruct((B, c_out, T_pad), jnp.float32),
        grid=(B,),
        in_specs=in_specs,
        out_specs=pl.BlockSpec((1, c_out, T_pad), lambda b: (b, 0, 0)),
        compiler_params=pltpu.CompilerParams(
            dimension_semantics=("parallel",),
            vmem_limit_bytes=48 * 1024 * 1024,
        ),
    )(xy_taps, scr_taps, *weights)

    out = out[:, :, :T_final]                                         # drop lane padding
    return jnp.transpose(out, (0, 2, 1)).reshape(B, T_final, j_out, 3)


# ----------------------------------------------------------------------------
# Parameter construction (deterministic, eval-mode BN as scale/bias)
# ----------------------------------------------------------------------------
def init_params(key, j_in, j_out, filter_widths, channels):
    keys = iter(jax.random.split(key, 128))

    def nrm(shape, s=0.1):
        return s * jax.random.normal(next(keys), shape, jnp.float32)

    def bn_params():
        gamma = 1.0 + 0.1 * jax.random.normal(next(keys), (channels,), jnp.float32)
        beta = 0.1 * jax.random.normal(next(keys), (channels,), jnp.float32)
        rm = 0.1 * jax.random.normal(next(keys), (channels,), jnp.float32)
        rv = jnp.abs(1.0 + 0.1 * jax.random.normal(next(keys), (channels,), jnp.float32))
        scale = gamma / jnp.sqrt(rv + 1e-5)
        bias = beta - rm * scale
        return scale.reshape(-1, 1), bias.reshape(-1, 1)

    fw0 = filter_widths[0]
    params = {
        # conv weights stored as (K, C_out, C_in)
        "expand_w": nrm((fw0, channels, j_in * 2)),
        "expand_conf_w": nrm((fw0, channels, j_in)),
        "expand_bn": bn_params(),
        "expand_bn_conf": bn_params(),
        "layers": [],
    }
    next_dilation = fw0
    for i in range(1, len(filter_widths)):
        fwi = filter_widths[i]
        params["layers"].append({
            "w1": nrm((fwi, channels, channels)),
            "bn1": bn_params(),
            "w2": nrm((1, channels, channels)),
            "bn2": bn_params(),
            "w_conf": nrm((fwi, channels, channels)),
            "bn_conf": bn_params(),
            "dilation": next_dilation,
        })
        next_dilation *= fwi
    params["shrink_w"] = nrm((1, j_out * 3, channels))
    params["shrink_b"] = nrm((j_out * 3,)).reshape(-1, 1)
    return params


# ----------------------------------------------------------------------------
# Pure-JAX reference (f32) for correctness check
# ----------------------------------------------------------------------------
def _ref_conv(x, w, dilation):
    K = w.shape[0]
    T_out = x.shape[2] - (K - 1) * dilation
    out = jnp.zeros((x.shape[0], w.shape[1], T_out), jnp.float32)
    for k in range(K):
        out = out + jnp.einsum("oc,bct->bot", w[k],
                               x[:, :, k * dilation: k * dilation + T_out])
    return out


def _ref_bn(y, sb):
    return y * sb[0][None] + sb[1][None]


def ref_forward(x, params, filter_widths, j_out):
    B, T, J, F = x.shape
    scr = jnp.transpose(x[..., -1], (0, 2, 1))
    xy = jnp.transpose(x[..., :-1].reshape(B, T, J * (F - 1)), (0, 2, 1))

    xs = jax.nn.relu(_ref_bn(_ref_conv(xy, params["expand_w"], 1), params["expand_bn"]))
    ss = jax.nn.sigmoid(_ref_bn(_ref_conv(scr, params["expand_conf_w"], 1),
                                params["expand_bn_conf"]))
    xs = xs + xs * ss

    pads, _ = _compute_pads_and_dilations(filter_widths)
    for i, layer in enumerate(params["layers"]):
        pad = pads[i + 1]
        res = xs[:, :, pad: xs.shape[2] - pad]
        d = layer["dilation"]
        x_mid = jax.nn.relu(_ref_bn(_ref_conv(xs + xs * ss, layer["w1"], d), layer["bn1"]))
        ss = jax.nn.sigmoid(_ref_bn(_ref_conv(ss, layer["w_conf"], d), layer["bn_conf"]))
        xs = res + jax.nn.relu(_ref_bn(_ref_conv(x_mid, layer["w2"], 1), layer["bn2"]))

    out = _ref_conv(xs, params["shrink_w"], 1) + params["shrink_b"][None]
    return jnp.transpose(out, (0, 2, 1)).reshape(B, -1, j_out, 3)


# ----------------------------------------------------------------------------
if __name__ == "__main__":
    key = jax.random.PRNGKey(0)
    B, T = 2, 16
    J_IN, J_OUT = 4, 4
    FILTER_WIDTHS = [3, 3]
    CHANNELS = 32

    kx, kp = jax.random.split(key)
    x = jax.random.normal(kx, (B, T, J_IN, 3), jnp.float32)
    # last feature is a confidence score in [0, 1]
    x = x.at[..., -1].set(jax.nn.sigmoid(x[..., -1]))

    params = init_params(kp, J_IN, J_OUT, FILTER_WIDTHS, CHANNELS)

    out = conf_temporal_model_v32_forward(x, params, FILTER_WIDTHS, J_OUT)
    out = jax.block_until_ready(out)

    ref = ref_forward(x, params, FILTER_WIDTHS, J_OUT)
    # receptive field = 1 + 2*(1 + 3) = 9  ->  T_out = 16 - 8 = 8
    assert out.shape == (B, 8, J_OUT, 3), out.shape
    np.testing.assert_allclose(np.asarray(out), np.asarray(ref), rtol=2e-2, atol=2e-2)

    print("KERNEL_OK")
</pallas_src>

<mosaic_0001>
module attributes {stable_mosaic.version = 11 : i64} {
  func.func @kernel(%arg0: i32, %arg1: memref<1x24x128xf32, #tpu.memory_space<vmem>>, %arg2: memref<1x12x128xf32, #tpu.memory_space<vmem>>, %arg3: memref<32x24xbf16, #tpu.memory_space<vmem>>, %arg4: memref<32x1xf32, #tpu.memory_space<vmem>>, %arg5: memref<32x12xbf16, #tpu.memory_space<vmem>>, %arg6: memref<32x1xf32, #tpu.memory_space<vmem>>, %arg7: memref<32x96xbf16, #tpu.memory_space<vmem>>, %arg8: memref<32x1xf32, #tpu.memory_space<vmem>>, %arg9: memref<32x96xbf16, #tpu.memory_space<vmem>>, %arg10: memref<32x1xf32, #tpu.memory_space<vmem>>, %arg11: memref<32x32xbf16, #tpu.memory_space<vmem>>, %arg12: memref<32x1xf32, #tpu.memory_space<vmem>>, %arg13: memref<12x32xbf16, #tpu.memory_space<vmem>>, %arg14: memref<12x1xf32, #tpu.memory_space<vmem>>, %arg15: memref<1x12x128xf32, #tpu.memory_space<vmem>>) attributes {dimension_semantics = [#tpu.dimension_semantics<parallel>], iteration_bounds = array<i64: 2>, scalar_prefetch = 0 : i64, scratch_operands = 0 : i64, tpu.core_type = #tpu.core_type<tc>, window_params = [{transform_indices = @transform_0, window_bounds = array<i64: 1, 24, 128>}, {transform_indices = @transform_1, window_bounds = array<i64: 1, 12, 128>}, {pipeline_mode = #tpu.pipeline_mode<synchronous>, transform_indices = @transform_2, window_bounds = array<i64: 32, 24>}, {pipeline_mode = #tpu.pipeline_mode<synchronous>, transform_indices = @transform_3, window_bounds = array<i64: 32, 1>}, {pipeline_mode = #tpu.pipeline_mode<synchronous>, transform_indices = @transform_4, window_bounds = array<i64: 32, 12>}, {pipeline_mode = #tpu.pipeline_mode<synchronous>, transform_indices = @transform_5, window_bounds = array<i64: 32, 1>}, {pipeline_mode = #tpu.pipeline_mode<synchronous>, transform_indices = @transform_6, window_bounds = array<i64: 32, 96>}, {pipeline_mode = #tpu.pipeline_mode<synchronous>, transform_indices = @transform_7, window_bounds = array<i64: 32, 1>}, {pipeline_mode = #tpu.pipeline_mode<synchronous>, transform_indices = @transform_8, window_bounds = array<i64: 32, 96>}, {pipeline_mode = #tpu.pipeline_mode<synchronous>, transform_indices = @transform_9, window_bounds = array<i64: 32, 1>}, {pipeline_mode = #tpu.pipeline_mode<synchronous>, transform_indices = @transform_10, window_bounds = array<i64: 32, 32>}, {pipeline_mode = #tpu.pipeline_mode<synchronous>, transform_indices = @transform_11, window_bounds = array<i64: 32, 1>}, {pipeline_mode = #tpu.pipeline_mode<synchronous>, transform_indices = @transform_12, window_bounds = array<i64: 12, 32>}, {pipeline_mode = #tpu.pipeline_mode<synchronous>, transform_indices = @transform_13, window_bounds = array<i64: 12, 1>}, {transform_indices = @transform_14, window_bounds = array<i64: 1, 12, 128>}]} {
    %c0 = arith.constant 0 : index
    %c0_0 = arith.constant 0 : index
    %c0_1 = arith.constant 0 : index
    %0 = vector.load %arg1[%c0, %c0_0, %c0_1] : memref<1x24x128xf32, #tpu.memory_space<vmem>>, vector<1x24x128xf32>
    %1 = vector.shape_cast %0 : vector<1x24x128xf32> to vector<24x128xf32>
    %2 = arith.truncf %1 : vector<24x128xf32> to vector<24x128xbf16>
    %c0_2 = arith.constant 0 : index
    %c0_3 = arith.constant 0 : index
    %3 = vector.load %arg3[%c0_2, %c0_3] : memref<32x24xbf16, #tpu.memory_space<vmem>>, vector<32x24xbf16>
    %cst = arith.constant dense<0.000000e+00> : vector<32x128xf32>
    %4 = tpu.matmul %3, %2, %cst {dimension_numbers = #tpu.dot_dimension_numbers<[1], [0], [0], [1], [0, 0, 1, 1], [], []>} : vector<32x24xbf16>, vector<24x128xbf16>, vector<32x128xf32> -> vector<32x128xf32>
    %c0_4 = arith.constant 0 : index
    %c0_5 = arith.constant 0 : index
    %5 = vector.load %arg4[%c0_4, %c0_5] : memref<32x1xf32, #tpu.memory_space<vmem>>, vector<32x1xf32>
    %6 = vector.broadcast %5 : vector<32x1xf32> to vector<32x128xf32>
    %7 = arith.addf %4, %6 : vector<32x128xf32>
    %cst_6 = arith.constant 0.000000e+00 : f32
    %8 = vector.broadcast %cst_6 : f32 to vector<32x128xf32>
    %9 = arith.maximumf %7, %8 : vector<32x128xf32>
    %c0_7 = arith.constant 0 : index
    %c0_8 = arith.constant 0 : index
    %c0_9 = arith.constant 0 : index
    %10 = vector.load %arg2[%c0_7, %c0_8, %c0_9] : memref<1x12x128xf32, #tpu.memory_space<vmem>>, vector<1x12x128xf32>
    %11 = vector.shape_cast %10 : vector<1x12x128xf32> to vector<12x128xf32>
    %12 = arith.truncf %11 : vector<12x128xf32> to vector<12x128xbf16>
    %c0_10 = arith.constant 0 : index
    %c0_11 = arith.constant 0 : index
    %13 = vector.load %arg5[%c0_10, %c0_11] : memref<32x12xbf16, #tpu.memory_space<vmem>>, vector<32x12xbf16>
    %cst_12 = arith.constant dense<0.000000e+00> : vector<32x128xf32>
    %14 = tpu.matmul %13, %12, %cst_12 {dimension_numbers = #tpu.dot_dimension_numbers<[1], [0], [0], [1], [0, 0, 1, 1], [], []>} : vector<32x12xbf16>, vector<12x128xbf16>, vector<32x128xf32> -> vector<32x128xf32>
    %c0_13 = arith.constant 0 : index
    %c0_14 = arith.constant 0 : index
    %15 = vector.load %arg6[%c0_13, %c0_14] : memref<32x1xf32, #tpu.memory_space<vmem>>, vector<32x1xf32>
    %16 = vector.broadcast %15 : vector<32x1xf32> to vector<32x128xf32>
    %17 = arith.addf %14, %16 : vector<32x128xf32>
    %cst_15 = arith.constant 0.000000e+00 : f32
    %18 = vector.broadcast %cst_15 : f32 to vector<32x128xf32>
    %19 = arith.subf %18, %17 : vector<32x128xf32>
    %20 = math.exp %19 : vector<32x128xf32>
    %cst_16 = arith.constant 1.000000e+00 : f32
    %21 = vector.broadcast %cst_16 : f32 to vector<32x128xf32>
    %22 = arith.addf %21, %20 : vector<32x128xf32>
    %23 = tpu.reciprocal %22 {approx = true} : vector<32x128xf32> -> vector<32x128xf32>
    %cst_17 = arith.constant 1.000000e+00 : f32
    %24 = vector.broadcast %cst_17 : f32 to vector<32x128xf32>
    %25 = arith.addf %24, %23 : vector<32x128xf32>
    %26 = arith.mulf %9, %25 : vector<32x128xf32>
    %cst_18 = arith.constant 1.000000e+00 : f32
    %27 = vector.broadcast %cst_18 : f32 to vector<32x128xf32>
    %28 = arith.addf %27, %23 : vector<32x128xf32>
    %29 = arith.mulf %26, %28 : vector<32x128xf32>
    %c125_i32 = arith.constant 125 : i32
    %30 = tpu.dynamic_rotate %29 by %c125_i32 dim 1 : vector<32x128xf32>, i32 -> vector<32x128xf32>
    %c122_i32 = arith.constant 122 : i32
    %31 = tpu.dynamic_rotate %29 by %c122_i32 dim 1 : vector<32x128xf32>, i32 -> vector<32x128xf32>
    %32 = tpu.concatenate %29, %30, %31 in 0 : vector<32x128xf32>, vector<32x128xf32>, vector<32x128xf32> -> vector<96x128xf32>
    %33 = arith.truncf %32 : vector<96x128xf32> to vector<96x128xbf16>
    %c0_19 = arith.constant 0 : index
    %c0_20 = arith.constant 0 : index
    %34 = vector.load %arg7[%c0_19, %c0_20] : memref<32x96xbf16, #tpu.memory_space<vmem>>, vector<32x96xbf16>
    %cst_21 = arith.constant dense<0.000000e+00> : vector<32x128xf32>
    %35 = tpu.matmul %34, %33, %cst_21 {dimension_numbers = #tpu.dot_dimension_numbers<[1], [0], [0], [1], [0, 0, 1, 1], [], []>} : vector<32x96xbf16>, vector<96x128xbf16>, vector<32x128xf32> -> vector<32x128xf32>
    %c0_22 = arith.constant 0 : index
    %c0_23 = arith.constant 0 : index
    %36 = vector.load %arg8[%c0_22, %c0_23] : memref<32x1xf32, #tpu.memory_space<vmem>>, vector<32x1xf32>
    %37 = vector.broadcast %36 : vector<32x1xf32> to vector<32x128xf32>
    %38 = arith.addf %35, %37 : vector<32x128xf32>
    %cst_24 = arith.constant 0.000000e+00 : f32
    %39 = vector.broadcast %cst_24 : f32 to vector<32x128xf32>
    %40 = arith.maximumf %38, %39 : vector<32x128xf32>
    %41 = arith.truncf %40 : vector<32x128xf32> to vector<32x128xbf16>
    %c0_25 = arith.constant 0 : index
    %c0_26 = arith.constant 0 : index
    %42 = vector.load %arg11[%c0_25, %c0_26] : memref<32x32xbf16, #tpu.memory_space<vmem>>, vector<32x32xbf16>
    %cst_27 = arith.constant dense<0.000000e+00> : vector<32x128xf32>
    %43 = tpu.matmul %42, %41, %cst_27 {dimension_numbers = #tpu.dot_dimension_numbers<[1], [0], [0], [1], [0, 0, 1, 1], [], []>} : vector<32x32xbf16>, vector<32x128xbf16>, vector<32x128xf32> -> vector<32x128xf32>
    %c0_28 = arith.constant 0 : index
    %c0_29 = arith.constant 0 : index
    %44 = vector.load %arg12[%c0_28, %c0_29] : memref<32x1xf32, #tpu.memory_space<vmem>>, vector<32x1xf32>
    %45 = vector.broadcast %44 : vector<32x1xf32> to vector<32x128xf32>
    %46 = arith.addf %43, %45 : vector<32x128xf32>
    %cst_30 = arith.constant 0.000000e+00 : f32
    %47 = vector.broadcast %cst_30 : f32 to vector<32x128xf32>
    %48 = arith.maximumf %46, %47 : vector<32x128xf32>
    %c125_i32_31 = arith.constant 125 : i32
    %49 = tpu.dynamic_rotate %26 by %c125_i32_31 dim 1 : vector<32x128xf32>, i32 -> vector<32x128xf32>
    %50 = arith.addf %49, %48 : vector<32x128xf32>
    %51 = arith.truncf %50 : vector<32x128xf32> to vector<32x128xbf16>
    %c0_32 = arith.constant 0 : index
    %c0_33 = arith.constant 0 : index
    %52 = vector.load %arg13[%c0_32, %c0_33] : memref<12x32xbf16, #tpu.memory_space<vmem>>, vector<12x32xbf16>
    %cst_34 = arith.constant dense<0.000000e+00> : vector<12x128xf32>
    %53 = tpu.matmul %52, %51, %cst_34 {dimension_numbers = #tpu.dot_dimension_numbers<[1], [0], [0], [1], [0, 0, 1, 1], [], []>} : vector<12x32xbf16>, vector<32x128xbf16>, vector<12x128xf32> -> vector<12x128xf32>
    %c0_35 = arith.constant 0 : index
    %c0_36 = arith.constant 0 : index
    %54 = vector.load %arg14[%c0_35, %c0_36] : memref<12x1xf32, #tpu.memory_space<vmem>>, vector<12x1xf32>
    %55 = vector.broadcast %54 : vector<12x1xf32> to vector<12x128xf32>
    %56 = arith.addf %53, %55 : vector<12x128xf32>
    %c0_37 = arith.constant 0 : index
    %c0_38 = arith.constant 0 : index
    %c0_39 = arith.constant 0 : index
    %57 = vector.load %arg15[%c0_37, %c0_38, %c0_39] : memref<1x12x128xf32, #tpu.memory_space<vmem>>, vector<1x12x128xf32>
    %58 = vector.shape_cast %57 : vector<1x12x128xf32> to vector<12x128xf32>
    %59 = vector.shape_cast %56 : vector<12x128xf32> to vector<1x12x128xf32>
    tpu.vector_store %arg15[%c0_37, %c0_38, %c0_39], %59 {strides = array<i32>} : memref<1x12x128xf32, #tpu.memory_space<vmem>>, vector<1x12x128xf32>,
    return
  }
  func.func @transform_0(%arg0: i32) -> (i32, i32, i32) {
    %c0_i32 = arith.constant 0 : i32
    %c0_i32_0 = arith.constant 0 : i32
    %c0_i32_1 = arith.constant 0 : i32
    return %arg0, %c0_i32, %c0_i32_0 : i32, i32, i32
  }
  func.func @transform_1(%arg0: i32) -> (i32, i32, i32) {
    %c0_i32 = arith.constant 0 : i32
    %c0_i32_0 = arith.constant 0 : i32
    %c0_i32_1 = arith.constant 0 : i32
    return %arg0, %c0_i32, %c0_i32_0 : i32, i32, i32
  }
  func.func @transform_2(%arg0: i32) -> (i32, i32) {
    %c0_i32 = arith.constant 0 : i32
    %c0_i32_0 = arith.constant 0 : i32
    %c0_i32_1 = arith.constant 0 : i32
    return %c0_i32, %c0_i32_0 : i32, i32
  }
  func.func @transform_3(%arg0: i32) -> (i32, i32) {
    %c0_i32 = arith.constant 0 : i32
    %c0_i32_0 = arith.constant 0 : i32
    %c0_i32_1 = arith.constant 0 : i32
    return %c0_i32, %c0_i32_0 : i32, i32
  }
  func.func @transform_4(%arg0: i32) -> (i32, i32) {
    %c0_i32 = arith.constant 0 : i32
    %c0_i32_0 = arith.constant 0 : i32
    %c0_i32_1 = arith.constant 0 : i32
    return %c0_i32, %c0_i32_0 : i32, i32
  }
  func.func @transform_5(%arg0: i32) -> (i32, i32) {
    %c0_i32 = arith.constant 0 : i32
    %c0_i32_0 = arith.constant 0 : i32
    %c0_i32_1 = arith.constant 0 : i32
    return %c0_i32, %c0_i32_0 : i32, i32
  }
  func.func @transform_6(%arg0: i32) -> (i32, i32) {
    %c0_i32 = arith.constant 0 : i32
    %c0_i32_0 = arith.constant 0 : i32
    %c0_i32_1 = arith.constant 0 : i32
    return %c0_i32, %c0_i32_0 : i32, i32
  }
  func.func @transform_7(%arg0: i32) -> (i32, i32) {
    %c0_i32 = arith.constant 0 : i32
    %c0_i32_0 = arith.constant 0 : i32
    %c0_i32_1 = arith.constant 0 : i32
    return %c0_i32, %c0_i32_0 : i32, i32
  }
  func.func @transform_8(%arg0: i32) -> (i32, i32) {
    %c0_i32 = arith.constant 0 : i32
    %c0_i32_0 = arith.constant 0 : i32
    %c0_i32_1 = arith.constant 0 : i32
    return %c0_i32, %c0_i32_0 : i32, i32
  }
  func.func @transform_9(%arg0: i32) -> (i32, i32) {
    %c0_i32 = arith.constant 0 : i32
    %c0_i32_0 = arith.constant 0 : i32
    %c0_i32_1 = arith.constant 0 : i32
    return %c0_i32, %c0_i32_0 : i32, i32
  }
  func.func @transform_10(%arg0: i32) -> (i32, i32) {
    %c0_i32 = arith.constant 0 : i32
    %c0_i32_0 = arith.constant 0 : i32
    %c0_i32_1 = arith.constant 0 : i32
    return %c0_i32, %c0_i32_0 : i32, i32
  }
  func.func @transform_11(%arg0: i32) -> (i32, i32) {
    %c0_i32 = arith.constant 0 : i32
    %c0_i32_0 = arith.constant 0 : i32
    %c0_i32_1 = arith.constant 0 : i32
    return %c0_i32, %c0_i32_0 : i32, i32
  }
  func.func @transform_12(%arg0: i32) -> (i32, i32) {
    %c0_i32 = arith.constant 0 : i32
    %c0_i32_0 = arith.constant 0 : i32
    %c0_i32_1 = arith.constant 0 : i32
    return %c0_i32, %c0_i32_0 : i32, i32
  }
  func.func @transform_13(%arg0: i32) -> (i32, i32) {
    %c0_i32 = arith.constant 0 : i32
    %c0_i32_0 = arith.constant 0 : i32
    %c0_i32_1 = arith.constant 0 : i32
    return %c0_i32, %c0_i32_0 : i32, i32
  }
  func.func @transform_14(%arg0: i32) -> (i32, i32, i32) {
    %c0_i32 = arith.constant 0 : i32
    %c0_i32_0 = arith.constant 0 : i32
    %c0_i32_1 = arith.constant 0 : i32
    return %arg0, %c0_i32, %c0_i32_0 : i32, i32, i32
  }
}

</mosaic_0001>

<llo_original>
// kernel: tpu_custom_call.1
$region0: #{tpu_custom_call.1}
  #allocation0 [shape = 'u32[]', space=smem, size = 0x4, offset = 0x4, fixed_abs, tag = 'smem constant byte address 0x4 - core index']
  #allocation1 [shape = 'u32[144,128]{1,0:T(1,128)}', space=vmem, size = 0x12000, scoped, tag = 'internal scratch']
  %s0 = inlined_call_operand.vmem [shape: f32[2,24,128], index: 0, kind: input, shape index: {}]
  %s1 = inlined_call_operand.vmem [shape: f32[2,12,128], index: 1, kind: input, shape index: {}]
  %s2 = inlined_call_operand.vmem [shape: bf16[32,24], index: 2, kind: input, shape index: {}]
  %s3 = inlined_call_operand.vmem [shape: f32[32,1], index: 3, kind: input, shape index: {}]
  %s4 = inlined_call_operand.vmem [shape: bf16[32,12], index: 4, kind: input, shape index: {}]
  %s5 = inlined_call_operand.vmem [shape: f32[32,1], index: 5, kind: input, shape index: {}]
  %s6 = inlined_call_operand.vmem [shape: bf16[32,96], index: 6, kind: input, shape index: {}]
  %s7 = inlined_call_operand.vmem [shape: f32[32,1], index: 7, kind: input, shape index: {}]
  %s8 = inlined_call_operand.vmem [shape: bf16[32,96], index: 8, kind: input, shape index: {}]
  %s9 = inlined_call_operand.vmem [shape: f32[32,1], index: 9, kind: input, shape index: {}]
  %s10 = inlined_call_operand.vmem [shape: bf16[32,32], index: 10, kind: input, shape index: {}]
  %s11 = inlined_call_operand.vmem [shape: f32[32,1], index: 11, kind: input, shape index: {}]
  %s12 = inlined_call_operand.vmem [shape: bf16[12,32], index: 12, kind: input, shape index: {}]
  %s13 = inlined_call_operand.vmem [shape: f32[12,1], index: 13, kind: input, shape index: {}]
  %s14 = inlined_call_operand.vmem [shape: f32[2,12,128], index: 14, kind: output, shape index: {}]
  %s15 = sld [smem:[#allocation0]]
  $region89: #{tpu_custom_call.1} parent=0
    _
  %s17 = ssub.s32 1, %s15
  %s18 = scalar_select 0, %s17, %s15
  loop: start=0, step=1, limit=4
  $region2: #{tpu_custom_call.1} parent=0 // loop_pre_header
    _
  $region3: #{tpu_custom_call.1} parent=0 // loop_header
    %s20 = sphi 0, %s24
    %p21 = scmp.ge.s32.totalorder %s20, 4
    %s30 = sphi 0, %s32
    %s33 = sphi 0, %s30
    %s34 = sphi 0, %s33
    %s50 = sphi 0, %s34
    %s56 = sphi 0, %s58
    %s59 = sphi 0, %s56
    %s60 = sphi 0, %s59
    %s76 = sphi 0, %s60
    %s80 = sphi 0, %s80
    %s82 = sphi 0, %s80
    %s83 = sphi 0, %s82
    %s97 = sphi 0, %s83
    %s101 = sphi 0, %s101
    %s103 = sphi 0, %s101
    %s104 = sphi 0, %s103
    %s118 = sphi 0, %s104
    %s122 = sphi 0, %s122
    %s124 = sphi 0, %s122
    %s125 = sphi 0, %s124
    %s139 = sphi 0, %s125
    %s143 = sphi 0, %s143
    %s145 = sphi 0, %s143
    %s146 = sphi 0, %s145
    %s160 = sphi 0, %s146
    %s164 = sphi 0, %s164
    %s166 = sphi 0, %s164
    %s167 = sphi 0, %s166
    %s181 = sphi 0, %s167
    %s185 = sphi 0, %s185
    %s187 = sphi 0, %s185
    %s188 = sphi 0, %s187
    %s202 = sphi 0, %s188
    %s206 = sphi 0, %s206
    %s208 = sphi 0, %s206
    %s209 = sphi 0, %s208
    %s223 = sphi 0, %s209
    %s227 = sphi 0, %s227
    %s229 = sphi 0, %s227
    %s230 = sphi 0, %s229
    %s244 = sphi 0, %s230
    %s248 = sphi 0, %s248
    %s250 = sphi 0, %s248
    %s251 = sphi 0, %s250
    %s265 = sphi 0, %s251
    %s269 = sphi 0, %s269
    %s271 = sphi 0, %s269
    %s272 = sphi 0, %s271
    %s286 = sphi 0, %s272
    %s290 = sphi 0, %s290
    %s292 = sphi 0, %s290
    %s293 = sphi 0, %s292
    %s307 = sphi 0, %s293
    %s311 = sphi 0, %s311
    %s313 = sphi 0, %s311
    %s314 = sphi 0, %s313
    %s328 = sphi 0, %s314
    %s334 = sphi 0, %s336
    %s337 = sphi 0, %s334
    %s338 = sphi 0, %s337
    %s354 = sphi 0, %s338
  $region4: #{tpu_custom_call.1} parent=0 // loop_header_branch
    %23 = sbr.rel (%p21) target = $region8
  $region5: #{tpu_custom_call.1} parent=0 // loop_body
    %s25 = ssub.s32 %s20, 1
    %s26 = ssub.s32 %s20, 2
    %s27 = sadd.s32 %s20, 1
    %s28 = ssub.s32 %s20, %s27
    %p29 = scmp.eq.s32.totalorder %s28, 0
    %s31 = sadd.s32 %s30, 1
    %s32 = scalar_select %p29, %s30, %s31
    %p35 = pneg %p29
    %p36 = scmp.eq.s32.totalorder %s20, 1
    %p37 = por %p35, %p36
    %p38 = scmp.ne.s32.totalorder %s30, %s33
    %p39 = scmp.eq.s32.totalorder %s20, 0
    %p40 = por %p38, %p39
    %p41 = scmp.ne.s32.totalorder %s30, %s33
    %p42 = scmp.eq.s32.totalorder %s25, 1
    %p43 = por %p41, %p42
    %p44 = scmp.ne.s32.totalorder %s33, %s34
    %p45 = scmp.eq.s32.totalorder %s25, 0
    %p46 = por %p44, %p45
    %p47 = scmp.ne.s32.totalorder %s33, %s34
    %p48 = scmp.eq.s32.totalorder %s26, 1
    %p49 = por %p47, %p48
    %p51 = scmp.ne.s32.totalorder %s34, %s50
    %p52 = scmp.eq.s32.totalorder %s26, 0
    %p53 = por %p51, %p52
    %s54 = ssub.s32 %s20, %s27
    %p55 = scmp.eq.s32.totalorder %s54, 0
    %s57 = sadd.s32 %s56, 1
    %s58 = scalar_select %p55, %s56, %s57
    %p61 = pneg %p55
    %p62 = scmp.eq.s32.totalorder %s20, 1
    %p63 = por %p61, %p62
    %p64 = scmp.ne.s32.totalorder %s56, %s59
    %p65 = scmp.eq.s32.totalorder %s20, 0
    %p66 = por %p64, %p65
    %p67 = scmp.ne.s32.totalorder %s56, %s59
    %p68 = scmp.eq.s32.totalorder %s25, 1
    %p69 = por %p67, %p68
    %p70 = scmp.ne.s32.totalorder %s59, %s60
    %p71 = scmp.eq.s32.totalorder %s25, 0
    %p72 = por %p70, %p71
    %p73 = scmp.ne.s32.totalorder %s59, %s60
    %p74 = scmp.eq.s32.totalorder %s26, 1
    %p75 = por %p73, %p74
    %p77 = scmp.ne.s32.totalorder %s60, %s76
    %p78 = scmp.eq.s32.totalorder %s26, 0
    %p79 = por %p77, %p78
    %s81 = sadd.s32 %s80, 1
    %p84 = scmp.eq.s32.totalorder %s20, 1
    %p85 = scmp.ne.s32.totalorder %s80, %s82
    %p86 = scmp.eq.s32.totalorder %s20, 0
    %p87 = por %p85, %p86
    %p88 = scmp.ne.s32.totalorder %s80, %s82
    %p89 = scmp.eq.s32.totalorder %s25, 1
    %p90 = por %p88, %p89
    %p91 = scmp.ne.s32.totalorder %s82, %s83
    %p92 = scmp.eq.s32.totalorder %s25, 0
    %p93 = por %p91, %p92
    %p94 = scmp.ne.s32.totalorder %s82, %s83
    %p95 = scmp.eq.s32.totalorder %s26, 1
    %p96 = por %p94, %p95
    %p98 = scmp.ne.s32.totalorder %s83, %s97
    %p99 = scmp.eq.s32.totalorder %s26, 0
    %p100 = por %p98, %p99
    %s102 = sadd.s32 %s101, 1
    %p105 = scmp.eq.s32.totalorder %s20, 1
    %p106 = scmp.ne.s32.totalorder %s101, %s103
    %p107 = scmp.eq.s32.totalorder %s20, 0
    %p108 = por %p106, %p107
    %p109 = scmp.ne.s32.totalorder %s101, %s103
    %p110 = scmp.eq.s32.totalorder %s25, 1
    %p111 = por %p109, %p110
    %p112 = scmp.ne.s32.totalorder %s103, %s104
    %p113 = scmp.eq.s32.totalorder %s25, 0
    %p114 = por %p112, %p113
    %p115 = scmp.ne.s32.totalorder %s103, %s104
    %p116 = scmp.eq.s32.totalorder %s26, 1
    %p117 = por %p115, %p116
    %p119 = scmp.ne.s32.totalorder %s104, %s118
    %p120 = scmp.eq.s32.totalorder %s26, 0
    %p121 = por %p119, %p120
    %s123 = sadd.s32 %s122, 1
    %p126 = scmp.eq.s32.totalorder %s20, 1
    %p127 = scmp.ne.s32.totalorder %s122, %s124
    %p128 = scmp.eq.s32.totalorder %s20, 0
    %p129 = por %p127, %p128
    %p130 = scmp.ne.s32.totalorder %s122, %s124
    %p131 = scmp.eq.s32.totalorder %s25, 1
    %p132 = por %p130, %p131
    %p133 = scmp.ne.s32.totalorder %s124, %s125
    %p134 = scmp.eq.s32.totalorder %s25, 0
    %p135 = por %p133, %p134
    %p136 = scmp.ne.s32.totalorder %s124, %s125
    %p137 = scmp.eq.s32.totalorder %s26, 1
    %p138 = por %p136, %p137
    %p140 = scmp.ne.s32.totalorder %s125, %s139
    %p141 = scmp.eq.s32.totalorder %s26, 0
    %p142 = por %p140, %p141
    %s144 = sadd.s32 %s143, 1
    %p147 = scmp.eq.s32.totalorder %s20, 1
    %p148 = scmp.ne.s32.totalorder %s143, %s145
    %p149 = scmp.eq.s32.totalorder %s20, 0
    %p150 = por %p148, %p149
    %p151 = scmp.ne.s32.totalorder %s143, %s145
    %p152 = scmp.eq.s32.totalorder %s25, 1
    %p153 = por %p151, %p152
    %p154 = scmp.ne.s32.totalorder %s145, %s146
    %p155 = scmp.eq.s32.totalorder %s25, 0
    %p156 = por %p154, %p155
    %p157 = scmp.ne.s32.totalorder %s145, %s146
    %p158 = scmp.eq.s32.totalorder %s26, 1
    %p159 = por %p157, %p158
    %p161 = scmp.ne.s32.totalorder %s146, %s160
    %p162 = scmp.eq.s32.totalorder %s26, 0
    %p163 = por %p161, %p162
    %s165 = sadd.s32 %s164, 1
    %p168 = scmp.eq.s32.totalorder %s20, 1
    %p169 = scmp.ne.s32.totalorder %s164, %s166
    %p170 = scmp.eq.s32.totalorder %s20, 0
    %p171 = por %p169, %p170
    %p172 = scmp.ne.s32.totalorder %s164, %s166
    %p173 = scmp.eq.s32.totalorder %s25, 1
    %p174 = por %p172, %p173
    %p175 = scmp.ne.s32.totalorder %s166, %s167
    %p176 = scmp.eq.s32.totalorder %s25, 0
    %p177 = por %p175, %p176
    %p178 = scmp.ne.s32.totalorder %s166, %s167
    %p179 = scmp.eq.s32.totalorder %s26, 1
    %p180 = por %p178, %p179
    %p182 = scmp.ne.s32.totalorder %s167, %s181
    %p183 = scmp.eq.s32.totalorder %s26, 0
    %p184 = por %p182, %p183
    %s186 = sadd.s32 %s185, 1
    %p189 = scmp.eq.s32.totalorder %s20, 1
    %p190 = scmp.ne.s32.totalorder %s185, %s187
    %p191 = scmp.eq.s32.totalorder %s20, 0
    %p192 = por %p190, %p191
    %p193 = scmp.ne.s32.totalorder %s185, %s187
    %p194 = scmp.eq.s32.totalorder %s25, 1
    %p195 = por %p193, %p194
    %p196 = scmp.ne.s32.totalorder %s187, %s188
    %p197 = scmp.eq.s32.totalorder %s25, 0
    %p198 = por %p196, %p197
    %p199 = scmp.ne.s32.totalorder %s187, %s188
    %p200 = scmp.eq.s32.totalorder %s26, 1
    %p201 = por %p199, %p200
    %p203 = scmp.ne.s32.totalorder %s188, %s202
    %p204 = scmp.eq.s32.totalorder %s26, 0
    %p205 = por %p203, %p204
    %s207 = sadd.s32 %s206, 1
    %p210 = scmp.eq.s32.totalorder %s20, 1
    %p211 = scmp.ne.s32.totalorder %s206, %s208
    %p212 = scmp.eq.s32.totalorder %s20, 0
    %p213 = por %p211, %p212
    %p214 = scmp.ne.s32.totalorder %s206, %s208
    %p215 = scmp.eq.s32.totalorder %s25, 1
    %p216 = por %p214, %p215
    %p217 = scmp.ne.s32.totalorder %s208, %s209
    %p218 = scmp.eq.s32.totalorder %s25, 0
    %p219 = por %p217, %p218
    %p220 = scmp.ne.s32.totalorder %s208, %s209
    %p221 = scmp.eq.s32.totalorder %s26, 1
    %p222 = por %p220, %p221
    %p224 = scmp.ne.s32.totalorder %s209, %s223
    %p225 = scmp.eq.s32.totalorder %s26, 0
    %p226 = por %p224, %p225
    %s228 = sadd.s32 %s227, 1
    %p231 = scmp.eq.s32.totalorder %s20, 1
    %p232 = scmp.ne.s32.totalorder %s227, %s229
    %p233 = scmp.eq.s32.totalorder %s20, 0
    %p234 = por %p232, %p233
    %p235 = scmp.ne.s32.totalorder %s227, %s229
    %p236 = scmp.eq.s32.totalorder %s25, 1
    %p237 = por %p235, %p236
    %p238 = scmp.ne.s32.totalorder %s229, %s230
    %p239 = scmp.eq.s32.totalorder %s25, 0
    %p240 = por %p238, %p239
    %p241 = scmp.ne.s32.totalorder %s229, %s230
    %p242 = scmp.eq.s32.totalorder %s26, 1
    %p243 = por %p241, %p242
    %p245 = scmp.ne.s32.totalorder %s230, %s244
    %p246 = scmp.eq.s32.totalorder %s26, 0
    %p247 = por %p245, %p246
    %s249 = sadd.s32 %s248, 1
    %p252 = scmp.eq.s32.totalorder %s20, 1
    %p253 = scmp.ne.s32.totalorder %s248, %s250
    %p254 = scmp.eq.s32.totalorder %s20, 0
    %p255 = por %p253, %p254
    %p256 = scmp.ne.s32.totalorder %s248, %s250
    %p257 = scmp.eq.s32.totalorder %s25, 1
    %p258 = por %p256, %p257
    %p259 = scmp.ne.s32.totalorder %s250, %s251
    %p260 = scmp.eq.s32.totalorder %s25, 0
    %p261 = por %p259, %p260
    %p262 = scmp.ne.s32.totalorder %s250, %s251
    %p263 = scmp.eq.s32.totalorder %s26, 1
    %p264 = por %p262, %p263
    %p266 = scmp.ne.s32.totalorder %s251, %s265
    %p267 = scmp.eq.s32.totalorder %s26, 0
    %p268 = por %p266, %p267
    %s270 = sadd.s32 %s269, 1
    %p273 = scmp.eq.s32.totalorder %s20, 1
    %p274 = scmp.ne.s32.totalorder %s269, %s271
    %p275 = scmp.eq.s32.totalorder %s20, 0
    %p276 = por %p274, %p275
    %p277 = scmp.ne.s32.totalorder %s269, %s271
    %p278 = scmp.eq.s32.totalorder %s25, 1
    %p279 = por %p277, %p278
    %p280 = scmp.ne.s32.totalorder %s271, %s272
    %p281 = scmp.eq.s32.totalorder %s25, 0
    %p282 = por %p280, %p281
    %p283 = scmp.ne.s32.totalorder %s271, %s272
    %p284 = scmp.eq.s32.totalorder %s26, 1
    %p285 = por %p283, %p284
    %p287 = scmp.ne.s32.totalorder %s272, %s286
    %p288 = scmp.eq.s32.totalorder %s26, 0
    %p289 = por %p287, %p288
    %s291 = sadd.s32 %s290, 1
    %p294 = scmp.eq.s32.totalorder %s20, 1
    %p295 = scmp.ne.s32.totalorder %s290, %s292
    %p296 = scmp.eq.s32.totalorder %s20, 0
    %p297 = por %p295, %p296
    %p298 = scmp.ne.s32.totalorder %s290, %s292
    %p299 = scmp.eq.s32.totalorder %s25, 1
    %p300 = por %p298, %p299
    %p301 = scmp.ne.s32.totalorder %s292, %s293
    %p302 = scmp.eq.s32.totalorder %s25, 0
    %p303 = por %p301, %p302
    %p304 = scmp.ne.s32.totalorder %s292, %s293
    %p305 = scmp.eq.s32.totalorder %s26, 1
    %p306 = por %p304, %p305
    %p308 = scmp.ne.s32.totalorder %s293, %s307
    %p309 = scmp.eq.s32.totalorder %s26, 0
    %p310 = por %p308, %p309
    %s312 = sadd.s32 %s311, 1
    %p315 = scmp.eq.s32.totalorder %s20, 1
    %p316 = scmp.ne.s32.totalorder %s311, %s313
    %p317 = scmp.eq.s32.totalorder %s20, 0
    %p318 = por %p316, %p317
    %p319 = scmp.ne.s32.totalorder %s311, %s313
    %p320 = scmp.eq.s32.totalorder %s25, 1
    %p321 = por %p319, %p320
    %p322 = scmp.ne.s32.totalorder %s313, %s314
    %p323 = scmp.eq.s32.totalorder %s25, 0
    %p324 = por %p322, %p323
    %p325 = scmp.ne.s32.totalorder %s313, %s314
    %p326 = scmp.eq.s32.totalorder %s26, 1
    %p327 = por %p325, %p326
    %p329 = scmp.ne.s32.totalorder %s314, %s328
    %p330 = scmp.eq.s32.totalorder %s26, 0
    %p331 = por %p329, %p330
    %s332 = ssub.s32 %s20, %s27
    %p333 = scmp.eq.s32.totalorder %s332, 0
    %s335 = sadd.s32 %s334, 1
    %s336 = scalar_select %p333, %s334, %s335
    %p339 = pneg %p333
    %p340 = scmp.eq.s32.totalorder %s20, 1
    %p341 = por %p339, %p340
    %p342 = scmp.ne.s32.totalorder %s334, %s337
    %p343 = scmp.eq.s32.totalorder %s20, 0
    %p344 = por %p342, %p343
    %p345 = scmp.ne.s32.totalorder %s334, %s337
    %p346 = scmp.eq.s32.totalorder %s25, 1
    %p347 = por %p345, %p346
    %p348 = scmp.ne.s32.totalorder %s337, %s338
    %p349 = scmp.eq.s32.totalorder %s25, 0
    %p350 = por %p348, %p349
    %p351 = scmp.ne.s32.totalorder %s337, %s338
    %p352 = scmp.eq.s32.totalorder %s26, 1
    %p353 = por %p351, %p352
    %p355 = scmp.ne.s32.totalorder %s338, %s354
    %p356 = scmp.eq.s32.totalorder %s26, 0
    %p357 = por %p355, %p356
    %p358 = scmp.le.s32.totalorder 1, %s20
    %p359 = scmp.lt.s32.totalorder %s20, 3
    %p360 = pnand %p358, %p359
    %p361 = pneg %p360
    // Predicated region
    $region9: #{tpu_custom_call.1} parent=5 // pred_check
      _
    $region10: #{tpu_custom_call.1} parent=5 // pred_check_branch
      %363 = sbr.rel (%p360) target = $region12
    $region11: #{tpu_custom_call.1} parent=5 // pred_region
      %s364 = ssub.s32 %s20, 1
      // Predicated region
      $region13: #{tpu_custom_call.1} parent=11 // pred_check
        %p365 = pneg %p93
      $region14: #{tpu_custom_call.1} parent=11 // pred_check_branch
        %367 = sbr.rel (%p365) target = $region16
      $region15: #{tpu_custom_call.1} parent=11 // pred_region
        _
      $region16: #{tpu_custom_call.1} parent=11 // pred_fallthru
        _
      // Predicated region
      $region17: #{tpu_custom_call.1} parent=11 // pred_check
        %p368 = pneg %p114
      $region18: #{tpu_custom_call.1} parent=11 // pred_check_branch
        %370 = sbr.rel (%p368) target = $region20
      $region19: #{tpu_custom_call.1} parent=11 // pred_region
        _
      $region20: #{tpu_custom_call.1} parent=11 // pred_fallthru
        _
      // Predicated region
      $region21: #{tpu_custom_call.1} parent=11 // pred_check
        %p371 = pneg %p135
      $region22: #{tpu_custom_call.1} parent=11 // pred_check_branch
        %373 = sbr.rel (%p371) target = $region24
      $region23: #{tpu_custom_call.1} parent=11 // pred_region
        _
      $region24: #{tpu_custom_call.1} parent=11 // pred_fallthru
        _
      // Predicated region
      $region25: #{tpu_custom_call.1} parent=11 // pred_check
        %p374 = pneg %p156
      $region26: #{tpu_custom_call.1} parent=11 // pred_check_branch
        %376 = sbr.rel (%p374) target = $region28
      $region27: #{tpu_custom_call.1} parent=11 // pred_region
        _
      $region28: #{tpu_custom_call.1} parent=11 // pred_fallthru
        _
      // Predicated region
      $region29: #{tpu_custom_call.1} parent=11 // pred_check
        %p377 = pneg %p177
      $region30: #{tpu_custom_call.1} parent=11 // pred_check_branch
        %379 = sbr.rel (%p377) target = $region32
      $region31: #{tpu_custom_call.1} parent=11 // pred_region
        _
      $region32: #{tpu_custom_call.1} parent=11 // pred_fallthru
        _
      // Predicated region
      $region33: #{tpu_custom_call.1} parent=11 // pred_check
        %p380 = pneg %p198
      $region34: #{tpu_custom_call.1} parent=11 // pred_check_branch
        %382 = sbr.rel (%p380) target = $region36
      $region35: #{tpu_custom_call.1} parent=11 // pred_region
        _
      $region36: #{tpu_custom_call.1} parent=11 // pred_fallthru
        _
      // Predicated region
      $region37: #{tpu_custom_call.1} parent=11 // pred_check
        %p383 = pneg %p219
      $region38: #{tpu_custom_call.1} parent=11 // pred_check_branch
        %385 = sbr.rel (%p383) target = $region40
      $region39: #{tpu_custom_call.1} parent=11 // pred_region
        _
      $region40: #{tpu_custom_call.1} parent=11 // pred_fallthru
        _
      // Predicated region
      $region41: #{tpu_custom_call.1} parent=11 // pred_check
        %p386 = pneg %p240
      $region42: #{tpu_custom_call.1} parent=11 // pred_check_branch
        %388 = sbr.rel (%p386) target = $region44
      $region43: #{tpu_custom_call.1} parent=11 // pred_region
        _
      $region44: #{tpu_custom_call.1} parent=11 // pred_fallthru
        _
      // Predicated region
      $region45: #{tpu_custom_call.1} parent=11 // pred_check
        %p389 = pneg %p261
      $region46: #{tpu_custom_call.1} parent=11 // pred_check_branch
        %391 = sbr.rel (%p389) target = $region48
      $region47: #{tpu_custom_call.1} parent=11 // pred_region
        _
      $region48: #{tpu_custom_call.1} parent=11 // pred_fallthru
        _
      // Predicated region
      $region49: #{tpu_custom_call.1} parent=11 // pred_check
        %p392 = pneg %p282
      $region50: #{tpu_custom_call.1} parent=11 // pred_check_branch
        %394 = sbr.rel (%p392) target = $region52
      $region51: #{tpu_custom_call.1} parent=11 // pred_region
        _
      $region52: #{tpu_custom_call.1} parent=11 // pred_fallthru
        _
      // Predicated region
      $region53: #{tpu_custom_call.1} parent=11 // pred_check
        %p395 = pneg %p303
      $region54: #{tpu_custom_call.1} parent=11 // pred_check_branch
        %397 = sbr.rel (%p395) target = $region56
      $region55: #{tpu_custom_call.1} parent=11 // pred_region
        _
      $region56: #{tpu_custom_call.1} parent=11 // pred_fallthru
        _
      // Predicated region
      $region57: #{tpu_custom_call.1} parent=11 // pred_check
        %p398 = pneg %p324
      $region58: #{tpu_custom_call.1} parent=11 // pred_check_branch
        %400 = sbr.rel (%p398) target = $region60
      $region59: #{tpu_custom_call.1} parent=11 // pred_region
        _
      $region60: #{tpu_custom_call.1} parent=11 // pred_fallthru
        _
    $region12: #{tpu_custom_call.1} parent=5 // pred_fallthru
      _
    %p401 = scmp.lt.s32.totalorder %s20, 2
    // Predicated region
    $region61: #{tpu_custom_call.1} parent=5 // pred_check
      %p402 = pneg %p401
    $region62: #{tpu_custom_call.1} parent=5 // pred_check_branch
      %404 = sbr.rel (%p402) target = $region64
    $region63: #{tpu_custom_call.1} parent=5 // pred_region
      // Predicated region
      $region65: #{tpu_custom_call.1} parent=63 // pred_check
        %p405 = pneg %p40
      $region66: #{tpu_custom_call.1} parent=63 // pred_check_branch
        %407 = sbr.rel (%p405) target = $region68
      $region67: #{tpu_custom_call.1} parent=63 // pred_region
        %p408 = scmp.lt.s32.totalorder %s20, 1
        %s409 = scalar_select %p408, %s20, 1
        %s410 = smul.addr %s409, 3
        %s411 = smul.addr %s410, 8
        %s412 = scalar_lea.vmem %s0, %s411
      $region68: #{tpu_custom_call.1} parent=63 // pred_fallthru
        _
      // Predicated region
      $region69: #{tpu_custom_call.1} parent=63 // pred_check
        %p413 = pneg %p66
      $region70: #{tpu_custom_call.1} parent=63 // pred_check_branch
        %415 = sbr.rel (%p413) target = $region72
      $region71: #{tpu_custom_call.1} parent=63 // pred_region
        %p416 = scmp.lt.s32.totalorder %s20, 1
        %s417 = scalar_select %p416, %s20, 1
        %s418 = smul.addr %s417, 2
        %s419 = smul.addr %s418, 8
        %s420 = scalar_lea.vmem %s1, %s419
      $region72: #{tpu_custom_call.1} parent=63 // pred_fallthru
        _
    $region64: #{tpu_custom_call.1} parent=5 // pred_fallthru
      _
    %p421 = scmp.le.s32.totalorder 1, %s20
    %p422 = scmp.lt.s32.totalorder %s20, 3
    %p423 = pnand %p421, %p422
    %p424 = pneg %p423
    // Predicated region
    $region73: #{tpu_custom_call.1} parent=5 // pred_check
      _
    $region74: #{tpu_custom_call.1} parent=5 // pred_check_branch
      %426 = sbr.rel (%p423) target = $region76
    $region75: #{tpu_custom_call.1} parent=5 // pred_region
      %s427 = ssub.s32 %s20, 1
      %p428 = scmp.lt.s32.totalorder %s25, 1
      %s429 = scalar_select %p428, %s25, 1
      %s430 = smul.addr %s429, 3
      %s431 = smul.addr %s430, 8
      %s432 = scalar_lea.vmem %s0, %s431
      %p433 = pneg %p46
      %p434 = pneg %p43
      %p435 = scmp.lt.s32.totalorder %s25, 1
      %s436 = scalar_select %p435, %s25, 1
      %s437 = smul.addr %s436, 2
      %s438 = smul.addr %s437, 8
      %s439 = scalar_lea.vmem %s1, %s438
      %p440 = pneg %p72
      %p441 = pneg %p69
      %p442 = pneg %p93
      %p443 = pneg %p90
      %p444 = pneg %p114
      %p445 = pneg %p111
      %p446 = pneg %p135
      %p447 = pneg %p132
      %p448 = pneg %p156
      %p449 = pneg %p153
      %p450 = pneg %p177
      %p451 = pneg %p174
      %p452 = pneg %p198
      %p453 = pneg %p195
      %p454 = pneg %p219
      %p455 = pneg %p216
      %p456 = pneg %p240
      %p457 = pneg %p237
      %p458 = pneg %p261
      %p459 = pneg %p258
      %p460 = pneg %p282
      %p461 = pneg %p279
      %p462 = pneg %p303
      %p463 = pneg %p300
      %p464 = pneg %p324
      %p465 = pneg %p321
      %p466 = pneg %p350
      %p467 = pneg %p347
      %p468 = scmp.lt.s32.totalorder %s25, 1
      %s469 = scalar_select %p468, %s25, 1
      %s470 = smul.addr %s469, 2
      %s471 = smul.addr %s470, 8
      %s472 = scalar_lea.vmem %s14, %s471
      %p473 = scmp.lt.s32.totalorder %s25, 1
      %s474 = scalar_select %p473, %s25, 1
      %s475 = smul.addr %s474, 3
      %s476 = smul.addr %s475, 8
      %s477 = scalar_lea.vmem %s0, %s476
      %p478 = scmp.lt.s32.totalorder %s25, 1
      %s479 = scalar_select %p478, %s25, 1
      %s480 = smul.addr %s479, 2
      %s481 = smul.addr %s480, 8
      %s482 = scalar_lea.vmem %s1, %s481
      %p483 = scmp.lt.s32.totalorder %s25, 1
      %s484 = scalar_select %p483, %s25, 1
      %s485 = smul.addr %s484, 2
      %s486 = smul.addr %s485, 8
      %s487 = scalar_lea.vmem %s14, %s486
      %v489 = vld [vmem:[%s477] sm:$0xff]
      %v490 = vld [vmem:[%s477 + $0x8] sm:$0xff]
      %v491 = vld [vmem:[%s477 + $0x10] sm:$0xff]
      %v492 = vpack.c.bf16 %v490, %v489
      %v493 = vpack.c.bf16 %v491, %v491
      %v494 = vld [vmem:[%s2] sm:$0xf]
      %v495 = vld [vmem:[%s2 + $0x4] sm:$0xf]
      %v496 = vld [vmem:[%s2 + $0x8] sm:$0xf]
      %v497 = vld [vmem:[%s2 + $0xc] sm:$0xf]
      %v498 = vld [vmem:[%s3] sm:$0xff]
      %v499 = vld [vmem:[%s3 + $0x8] sm:$0xff]
      %v500 = vld [vmem:[%s3 + $0x10] sm:$0xff]
      %v501 = vld [vmem:[%s3 + $0x18] sm:$0xff]
      %503 = vset.pattern.permute.xlu0 0
      %504 = vperm.xlu0 %503, %v498
      %v505 = vpop.permute.xlu0 %504
      %508 = vset.pattern.permute.xlu0 0
      %509 = vperm.xlu0 %508, %v499
      %v510 = vpop.permute.xlu0 %509
      %513 = vset.pattern.permute.xlu0 0
      %514 = vperm.xlu0 %513, %v500
      %v515 = vpop.permute.xlu0 %514
      %518 = vset.pattern.permute.xlu0 0
      %519 = vperm.xlu0 %518, %v501
      %v520 = vpop.permute.xlu0 %519
      %v526 = vunpack.c.l.b16 %v494
      %v527 = vunpack.c.l.b16 %v495
      %v528 = vunpack.c.l.b16 %v496
      %v529 = vunpack.c.l.b16 %v497
      %v530 = vpack.c.b16 %v527, %v526
      %v531 = vpack.c.b16 %v529, %v528
      %vm532 = vcmask 195584
      %v534 = vsel %vm532, %v530, 0
      %v537 = vsel %vm532, %v531, 0
      %vm539 = vcmask 1043456
      %v541 = vsel %vm539, %v493, 0
      %543 = vmatprep.subr.bf16.mxu0 0
      %544 = vmatpush1.bf16.msra.mxu0 0
      %545 = vmatprep.subr.bf16.mxu0 0
      %546 = vmatpush1.bf16.msra.mxu0 0
      %547 = vmatprep.subr.bf16.mxu0 0
      %548 = vmatpush1.bf16.msra.mxu0 0
      %549 = vmatprep.subr.bf16.mxu0 0
      %550 = vmatpush1.bf16.msra.mxu0 0
      %551 = vmatprep.subr.bf16.mxu0 0
      %552 = vmatpush1.bf16.msra.mxu0 0
      %553 = vmatprep.subr.bf16.mxu0 0
      %554 = vmatpush1.bf16.msra.mxu0 0
      %555 = vmatprep.subr.bf16.mxu0 0
      %556 = vmatpush1.bf16.msra.mxu0 %v541
      %557 = vmatprep.subr.bf16.mxu0 0
      %558 = vmatpush1.bf16.msra.mxu0 %v492
      %559 = vmatprep.subr.bf16.mxu0 0
      %560 = vmatpush2.bf16.msra.mxu0 0
      %561 = vmatprep.subr.bf16.mxu0 0
      %562 = vmatpush2.bf16.msra.mxu0 0
      %563 = vmatprep.subr.bf16.mxu0 0
      %564 = vmatpush2.bf16.msra.mxu0 0
      %565 = vmatprep.subr.bf16.mxu0 0
      %566 = vmatpush2.bf16.msra.mxu0 0
      %567 = vmatprep.subr.bf16.mxu0 0
      %568 = vmatpush2.bf16.msra.mxu0 0
      %569 = vmatprep.subr.bf16.mxu0 0
      %570 = vmatpush2.bf16.msra.mxu0 0
      %571 = vmatprep.subr.bf16.mxu0 0
      %572 = vmatpush2.bf16.msra.mxu0 0
      %573 = vmatprep.subr.bf16.mxu0 0
      %574 = vmatpush2.bf16.msra.mxu0 0
      %575 = vmatprep.mubr.bf16.mxu0 0
      %576 = vmatmul.mubr.bf16.gmra.mxu0 %v534
      %v577 = vpop.f32.mrf.mxu0
      %v578 = vadd.f32 %v505, %v577
      %v579 = vpop.f32.mrf.mxu0
      %v580 = vpop.f32.mrf.mxu0
      %v581 = vadd.f32 %v510, %v580
      %v582 = vpop.f32.mrf.mxu0
      %583 = vmatprep.mubr.bf16.mxu0 0
      %584 = vmatmul.mubr.bf16.gmra.mxu0 %v537
      %v585 = vpop.f32.mrf.mxu0
      %v586 = vadd.f32 %v515, %v585
      %v587 = vpop.f32.mrf.mxu0
      %v588 = vpop.f32.mrf.mxu0
      %v589 = vadd.f32 %v520, %v588
      %v590 = vpop.f32.mrf.mxu0
      %591 = vdwg.mxu0
      %v592 = vmax.f32 %v578, 0.0
      %v593 = vmax.f32 %v581, 0.0
      %v594 = vmax.f32 %v586, 0.0
      %v595 = vmax.f32 %v589, 0.0
      %v596 = vld [vmem:[%s482] sm:$0xff]
      %v597 = vld [vmem:[%s482 + $0x8] sm:$0xf]
      %v598 = vpack.c.bf16 %v597, %v596
      %v599 = vld [vmem:[%s4] sm:$0xf]
      %v600 = vld [vmem:[%s4 + $0x4] sm:$0xf]
      %v601 = vld [vmem:[%s4 + $0x8] sm:$0xf]
      %v602 = vld [vmem:[%s4 + $0xc] sm:$0xf]
      %v603 = vld [vmem:[%s5] sm:$0xff]
      %v604 = vld [vmem:[%s5 + $0x8] sm:$0xff]
      %v605 = vld [vmem:[%s5 + $0x10] sm:$0xff]
      %v606 = vld [vmem:[%s5 + $0x18] sm:$0xff]
      %608 = vset.pattern.permute.xlu0 0
      %609 = vperm.xlu0 %608, %v603
      %v610 = vpop.permute.xlu0 %609
      %613 = vset.pattern.permute.xlu0 0
      %614 = vperm.xlu0 %613, %v604
      %v615 = vpop.permute.xlu0 %614
      %618 = vset.pattern.permute.xlu0 0
      %619 = vperm.xlu0 %618, %v605
      %v620 = vpop.permute.xlu0 %619
      %623 = vset.pattern.permute.xlu0 0
      %624 = vperm.xlu0 %623, %v606
      %v625 = vpop.permute.xlu0 %624
      %v631 = vunpack.c.l.b16 %v599
      %v632 = vunpack.c.l.b16 %v600
      %v633 = vunpack.c.l.b16 %v601
      %v634 = vunpack.c.l.b16 %v602
      %v635 = vpack.c.b16 %v632, %v631
      %v636 = vpack.c.b16 %v634, %v633
      %vm637 = vcmask 97280
      %v639 = vsel %vm637, %v635, 0
      %v642 = vsel %vm637, %v636, 0
      %vm644 = vcmask 1045504
      %v646 = vsel %vm644, %v598, 0
      %648 = vmatprep.subr.bf16.mxu0 0
      %649 = vmatpush1.bf16.msra.mxu0 0
      %650 = vmatprep.subr.bf16.mxu0 0
      %651 = vmatpush1.bf16.msra.mxu0 0
      %652 = vmatprep.subr.bf16.mxu0 0
      %653 = vmatpush1.bf16.msra.mxu0 0
      %654 = vmatprep.subr.bf16.mxu0 0
      %655 = vmatpush1.bf16.msra.mxu0 0
      %656 = vmatprep.subr.bf16.mxu0 0
      %657 = vmatpush1.bf16.msra.mxu0 0
      %658 = vmatprep.subr.bf16.mxu0 0
      %659 = vmatpush1.bf16.msra.mxu0 0
      %660 = vmatprep.subr.bf16.mxu0 0
      %661 = vmatpush1.bf16.msra.mxu0 0
      %662 = vmatprep.subr.bf16.mxu0 0
      %663 = vmatpush1.bf16.msra.mxu0 %v646
      %664 = vmatprep.subr.bf16.mxu0 0
      %665 = vmatpush2.bf16.msra.mxu0 0
      %666 = vmatprep.subr.bf16.mxu0 0
      %667 = vmatpush2.bf16.msra.mxu0 0
      %668 = vmatprep.subr.bf16.mxu0 0
      %669 = vmatpush2.bf16.msra.mxu0 0
      %670 = vmatprep.subr.bf16.mxu0 0
      %671 = vmatpush2.bf16.msra.mxu0 0
      %672 = vmatprep.subr.bf16.mxu0 0
      %673 = vmatpush2.bf16.msra.mxu0 0
      %674 = vmatprep.subr.bf16.mxu0 0
      %675 = vmatpush2.bf16.msra.mxu0 0
      %676 = vmatprep.subr.bf16.mxu0 0
      %677 = vmatpush2.bf16.msra.mxu0 0
      %678 = vmatprep.subr.bf16.mxu0 0
      %679 = vmatpush2.bf16.msra.mxu0 0
      %680 = vmatprep.mubr.bf16.mxu0 0
      %681 = vmatmul.mubr.bf16.gmra.mxu0 %v639
      %v682 = vpop.f32.mrf.mxu0
      %v683 = vadd.f32 %v610, %v682
      %v684 = vpop.f32.mrf.mxu0
      %v685 = vpop.f32.mrf.mxu0
      %v686 = vadd.f32 %v615, %v685
      %v687 = vpop.f32.mrf.mxu0
      %688 = vmatprep.mubr.bf16.mxu0 0
      %689 = vmatmul.mubr.bf16.gmra.mxu0 %v642
      %v690 = vpop.f32.mrf.mxu0
      %v691 = vadd.f32 %v620, %v690
      %v692 = vpop.f32.mrf.mxu0
      %v693 = vpop.f32.mrf.mxu0
      %v694 = vadd.f32 %v625, %v693
      %v695 = vpop.f32.mrf.mxu0
      %696 = vdwg.mxu0
      %v697 = vsub.f32 0.0, %v683
      %v698 = vsub.f32 0.0, %v686
      %v699 = vsub.f32 0.0, %v691
      %v700 = vsub.f32 0.0, %v694
      %v701 = vmul.f32 %v697, 1.442695
      %v702 = vpow.pop %v701
      %v703 = vmul.f32 %v698, 1.442695
      %v704 = vpow.pop %v703
      %v705 = vmul.f32 %v699, 1.442695
      %v706 = vpow.pop %v705
      %v707 = vmul.f32 %v700, 1.442695
      %v708 = vpow.pop %v707
      %v709 = vadd.f32 %v702, 1.0
      %v710 = vadd.f32 %v704, 1.0
      %v711 = vadd.f32 %v706, 1.0
      %v712 = vadd.f32 %v708, 1.0
      %v713 = vrcp.pop %v709
      %v714 = vrcp.pop %v710
      %v715 = vrcp.pop %v711
      %v716 = vrcp.pop %v712
      %v717 = vadd.f32 %v713, 1.0
      %v718 = vadd.f32 %v714, 1.0
      %v719 = vadd.f32 %v715, 1.0
      %v720 = vadd.f32 %v716, 1.0
      %v721 = vmul.f32 %v592, %v717
      %v722 = vmul.f32 %v593, %v718
      %v723 = vmul.f32 %v594, %v719
      %v724 = vmul.f32 %v595, %v720
      %v725 = vmul.f32 %v721, %v717
      %v726 = vmul.f32 %v722, %v718
      %v727 = vmul.f32 %v723, %v719
      %v728 = vmul.f32 %v724, %v720
      %729 = vrot.lane.b32.xlu0 %v725, 125
      %v730 = vpop.permute.xlu0 %729
      %731 = vrot.lane.b32.xlu0 %v726, 125
      %v732 = vpop.permute.xlu0 %731
      %733 = vrot.lane.b32.xlu0 %v727, 125
      %v734 = vpop.permute.xlu0 %733
      %735 = vrot.lane.b32.xlu0 %v728, 125
      %v736 = vpop.permute.xlu0 %735
      %737 = vrot.lane.b32.xlu0 %v725, 122
      %v738 = vpop.permute.xlu0 %737
      %739 = vrot.lane.b32.xlu0 %v726, 122
      %v740 = vpop.permute.xlu0 %739
      %741 = vrot.lane.b32.xlu0 %v727, 122
      %v742 = vpop.permute.xlu0 %741
      %743 = vrot.lane.b32.xlu0 %v728, 122
      %v744 = vpop.permute.xlu0 %743
      %v745 = vpack.c.bf16 %v726, %v725
      %v746 = vpack.c.bf16 %v728, %v727
      %v747 = vpack.c.bf16 %v732, %v730
      %v748 = vpack.c.bf16 %v736, %v734
      %v749 = vpack.c.bf16 %v740, %v738
      %v750 = vpack.c.bf16 %v744, %v742
      %v751 = vld [vmem:[%s6] sm:$0xf]
      %v752 = vld [vmem:[%s6 + $0x4] sm:$0xf]
      %v753 = vld [vmem:[%s6 + $0x8] sm:$0xf]
      %v754 = vld [vmem:[%s6 + $0xc] sm:$0xf]
      %v755 = vld [vmem:[%s7] sm:$0xff]
      %v756 = vld [vmem:[%s7 + $0x8] sm:$0xff]
      %v757 = vld [vmem:[%s7 + $0x10] sm:$0xff]
      %v758 = vld [vmem:[%s7 + $0x18] sm:$0xff]
      %760 = vset.pattern.permute.xlu0 0
      %761 = vperm.xlu0 %760, %v755
      %v762 = vpop.permute.xlu0 %761
      %765 = vset.pattern.permute.xlu0 0
      %766 = vperm.xlu0 %765, %v756
      %v767 = vpop.permute.xlu0 %766
      %770 = vset.pattern.permute.xlu0 0
      %771 = vperm.xlu0 %770, %v757
      %v772 = vpop.permute.xlu0 %771
      %775 = vset.pattern.permute.xlu0 0
      %776 = vperm.xlu0 %775, %v758
      %v777 = vpop.permute.xlu0 %776
      %v783 = vunpack.c.l.b16 %v751
      %v784 = vunpack.c.l.b16 %v752
      %v785 = vunpack.c.l.b16 %v753
      %v786 = vunpack.c.l.b16 %v754
      %v787 = vpack.c.b16 %v784, %v783
      %v788 = vpack.c.b16 %v786, %v785
      %vm789 = vcmask 785408
      %v791 = vsel %vm789, %v787, 0
      %v794 = vsel %vm789, %v788, 0
      %796 = vmatprep.subr.bf16.mxu0 0
      %797 = vmatpush1.bf16.msra.mxu0 0
      %798 = vmatprep.subr.bf16.mxu0 0
      %799 = vmatpush1.bf16.msra.mxu0 0
      %800 = vmatprep.subr.bf16.mxu0 0
      %801 = vmatpush1.bf16.msra.mxu0 %v750
      %802 = vmatprep.subr.bf16.mxu0 0
      %803 = vmatpush1.bf16.msra.mxu0 %v749
      %804 = vmatprep.subr.bf16.mxu0 0
      %805 = vmatpush1.bf16.msra.mxu0 %v748
      %806 = vmatprep.subr.bf16.mxu0 0
      %807 = vmatpush1.bf16.msra.mxu0 %v747
      %808 = vmatprep.subr.bf16.mxu0 0
      %809 = vmatpush1.bf16.msra.mxu0 %v746
      %810 = vmatprep.subr.bf16.mxu0 0
      %811 = vmatpush1.bf16.msra.mxu0 %v745
      %812 = vmatprep.subr.bf16.mxu0 0
      %813 = vmatpush2.bf16.msra.mxu0 0
      %814 = vmatprep.subr.bf16.mxu0 0
      %815 = vmatpush2.bf16.msra.mxu0 0
      %816 = vmatprep.subr.bf16.mxu0 0
      %817 = vmatpush2.bf16.msra.mxu0 0
      %818 = vmatprep.subr.bf16.mxu0 0
      %819 = vmatpush2.bf16.msra.mxu0 0
      %820 = vmatprep.subr.bf16.mxu0 0
      %821 = vmatpush2.bf16.msra.mxu0 0
      %822 = vmatprep.subr.bf16.mxu0 0
      %823 = vmatpush2.bf16.msra.mxu0 0
      %824 = vmatprep.subr.bf16.mxu0 0
      %825 = vmatpush2.bf16.msra.mxu0 0
      %826 = vmatprep.subr.bf16.mxu0 0
      %827 = vmatpush2.bf16.msra.mxu0 0
      %828 = vmatprep.mubr.bf16.mxu0 0
      %829 = vmatmul.mubr.bf16.gmra.mxu0 %v791
      %v830 = vpop.f32.mrf.mxu0
      %v831 = vadd.f32 %v762, %v830
      %v832 = vpop.f32.mrf.mxu0
      %v833 = vpop.f32.mrf.mxu0
      %v834 = vadd.f32 %v767, %v833
      %v835 = vpop.f32.mrf.mxu0
      %836 = vmatprep.mubr.bf16.mxu0 0
      %837 = vmatmul.mubr.bf16.gmra.mxu0 %v794
      %v838 = vpop.f32.mrf.mxu0
      %v839 = vadd.f32 %v772, %v838
      %v840 = vpop.f32.mrf.mxu0
      %v841 = vpop.f32.mrf.mxu0
      %v842 = vadd.f32 %v777, %v841
      %v843 = vpop.f32.mrf.mxu0
      %844 = vdwg.mxu0
      %v845 = vmax.f32 %v831, 0.0
      %v846 = vmax.f32 %v834, 0.0
      %v847 = vmax.f32 %v839, 0.0
      %v848 = vmax.f32 %v842, 0.0
      %v849 = vpack.c.bf16 %v846, %v845
      %v850 = vpack.c.bf16 %v848, %v847
      %v851 = vld [vmem:[%s10] sm:$0xf]
      %v852 = vld [vmem:[%s10 + $0x4] sm:$0xf]
      %v853 = vld [vmem:[%s10 + $0x8] sm:$0xf]
      %v854 = vld [vmem:[%s10 + $0xc] sm:$0xf]
      %v855 = vld [vmem:[%s11] sm:$0xff]
      %v856 = vld [vmem:[%s11 + $0x8] sm:$0xff]
      %v857 = vld [vmem:[%s11 + $0x10] sm:$0xff]
      %v858 = vld [vmem:[%s11 + $0x18] sm:$0xff]
      %860 = vset.pattern.permute.xlu0 0
      %861 = vperm.xlu0 %860, %v855
      %v862 = vpop.permute.xlu0 %861
      %865 = vset.pattern.permute.xlu0 0
      %866 = vperm.xlu0 %865, %v856
      %v867 = vpop.permute.xlu0 %866
      %870 = vset.pattern.permute.xlu0 0
      %871 = vperm.xlu0 %870, %v857
      %v872 = vpop.permute.xlu0 %871
      %875 = vset.pattern.permute.xlu0 0
      %876 = vperm.xlu0 %875, %v858
      %v877 = vpop.permute.xlu0 %876
      %v883 = vunpack.c.l.b16 %v851
      %v884 = vunpack.c.l.b16 %v852
      %v885 = vunpack.c.l.b16 %v853
      %v886 = vunpack.c.l.b16 %v854
      %v887 = vpack.c.b16 %v884, %v883
      %v888 = vpack.c.b16 %v886, %v885
      %vm889 = vcmask 261120
      %v891 = vsel %vm889, %v887, 0
      %v894 = vsel %vm889, %v888, 0
      %896 = vmatprep.subr.bf16.mxu0 0
      %897 = vmatpush1.bf16.msra.mxu0 0
      %898 = vmatprep.subr.bf16.mxu0 0
      %899 = vmatpush1.bf16.msra.mxu0 0
      %900 = vmatprep.subr.bf16.mxu0 0
      %901 = vmatpush1.bf16.msra.mxu0 0
      %902 = vmatprep.subr.bf16.mxu0 0
      %903 = vmatpush1.bf16.msra.mxu0 0
      %904 = vmatprep.subr.bf16.mxu0 0
      %905 = vmatpush1.bf16.msra.mxu0 0
      %906 = vmatprep.subr.bf16.mxu0 0
      %907 = vmatpush1.bf16.msra.mxu0 0
      %908 = vmatprep.subr.bf16.mxu0 0
      %909 = vmatpush1.bf16.msra.mxu0 %v850
      %910 = vmatprep.subr.bf16.mxu0 0
      %911 = vmatpush1.bf16.msra.mxu0 %v849
      %912 = vmatprep.subr.bf16.mxu0 0
      %913 = vmatpush2.bf16.msra.mxu0 0
      %914 = vmatprep.subr.bf16.mxu0 0
      %915 = vmatpush2.bf16.msra.mxu0 0
      %916 = vmatprep.subr.bf16.mxu0 0
      %917 = vmatpush2.bf16.msra.mxu0 0
      %918 = vmatprep.subr.bf16.mxu0 0
      %919 = vmatpush2.bf16.msra.mxu0 0
      %920 = vmatprep.subr.bf16.mxu0 0
      %921 = vmatpush2.bf16.msra.mxu0 0
      %922 = vmatprep.subr.bf16.mxu0 0
      %923 = vmatpush2.bf16.msra.mxu0 0
      %924 = vmatprep.subr.bf16.mxu0 0
      %925 = vmatpush2.bf16.msra.mxu0 0
      %926 = vmatprep.subr.bf16.mxu0 0
      %927 = vmatpush2.bf16.msra.mxu0 0
      %928 = vmatprep.mubr.bf16.mxu0 0
      %929 = vmatmul.mubr.bf16.gmra.mxu0 %v891
      %v930 = vpop.f32.mrf.mxu0
      %v931 = vadd.f32 %v862, %v930
      %v932 = vpop.f32.mrf.mxu0
      %v933 = vpop.f32.mrf.mxu0
      %v934 = vadd.f32 %v867, %v933
      %v935 = vpop.f32.mrf.mxu0
      %936 = vmatprep.mubr.bf16.mxu0 0
      %937 = vmatmul.mubr.bf16.gmra.mxu0 %v894
      %v938 = vpop.f32.mrf.mxu0
      %v939 = vadd.f32 %v872, %v938
      %v940 = vpop.f32.mrf.mxu0
      %v941 = vpop.f32.mrf.mxu0
      %v942 = vadd.f32 %v877, %v941
      %v943 = vpop.f32.mrf.mxu0
      %944 = vdwg.mxu0
      %v945 = vmax.f32 %v931, 0.0
      %v946 = vmax.f32 %v934, 0.0
      %v947 = vmax.f32 %v939, 0.0
      %v948 = vmax.f32 %v942, 0.0
      %949 = vrot.lane.b32.xlu0 %v721, 125
      %v950 = vpop.permute.xlu0 %949
      %951 = vrot.lane.b32.xlu0 %v722, 125
      %v952 = vpop.permute.xlu0 %951
      %953 = vrot.lane.b32.xlu0 %v723, 125
      %v954 = vpop.permute.xlu0 %953
      %955 = vrot.lane.b32.xlu0 %v724, 125
      %v956 = vpop.permute.xlu0 %955
      %v957 = vadd.f32 %v950, %v945
      %v958 = vadd.f32 %v952, %v946
      %v959 = vadd.f32 %v954, %v947
      %v960 = vadd.f32 %v956, %v948
      %v961 = vpack.c.bf16 %v958, %v957
      %v962 = vpack.c.bf16 %v960, %v959
      %v963 = vld [vmem:[%s12] sm:$0xf]
      %v964 = vld [vmem:[%s12 + $0x4] sm:$0x3]
      %v965 = vld [vmem:[%s13] sm:$0xff]
      %v966 = vld [vmem:[%s13 + $0x8] sm:$0xf]
      %968 = vset.pattern.permute.xlu0 0
      %969 = vperm.xlu0 %968, %v965
      %v970 = vpop.permute.xlu0 %969
      %973 = vset.pattern.permute.xlu0 0
      %974 = vperm.xlu0 %973, %v966
      %v975 = vpop.permute.xlu0 %974
      %v979 = vunpack.c.l.b16 %v963
      %v980 = vunpack.c.l.b16 %v964
      %v981 = vpack.c.b16 %v980, %v979
      %v983 = vsel %vm889, %v981, 0
      %985 = vmatprep.subr.bf16.mxu0 0
      %986 = vmatpush1.bf16.msra.mxu0 0
      %987 = vmatprep.subr.bf16.mxu0 0
      %988 = vmatpush1.bf16.msra.mxu0 0
      %989 = vmatprep.subr.bf16.mxu0 0
      %990 = vmatpush1.bf16.msra.mxu0 0
      %991 = vmatprep.subr.bf16.mxu0 0
      %992 = vmatpush1.bf16.msra.mxu0 0
      %993 = vmatprep.subr.bf16.mxu0 0
      %994 = vmatpush1.bf16.msra.mxu0 0
      %995 = vmatprep.subr.bf16.mxu0 0
      %996 = vmatpush1.bf16.msra.mxu0 0
      %997 = vmatprep.subr.bf16.mxu0 0
      %998 = vmatpush1.bf16.msra.mxu0 %v962
      %999 = vmatprep.subr.bf16.mxu0 0
      %1000 = vmatpush1.bf16.msra.mxu0 %v961
      %1001 = vmatprep.subr.bf16.mxu0 0
      %1002 = vmatpush2.bf16.msra.mxu0 0
      %1003 = vmatprep.subr.bf16.mxu0 0
      %1004 = vmatpush2.bf16.msra.mxu0 0
      %1005 = vmatprep.subr.bf16.mxu0 0
      %1006 = vmatpush2.bf16.msra.mxu0 0
      %1007 = vmatprep.subr.bf16.mxu0 0
      %1008 = vmatpush2.bf16.msra.mxu0 0
      %1009 = vmatprep.subr.bf16.mxu0 0
      %1010 = vmatpush2.bf16.msra.mxu0 0
      %1011 = vmatprep.subr.bf16.mxu0 0
      %1012 = vmatpush2.bf16.msra.mxu0 0
      %1013 = vmatprep.subr.bf16.mxu0 0
      %1014 = vmatpush2.bf16.msra.mxu0 0
      %1015 = vmatprep.subr.bf16.mxu0 0
      %1016 = vmatpush2.bf16.msra.mxu0 0
      %1017 = vmatprep.mubr.bf16.mxu0 0
      %1018 = vmatmul.mubr.bf16.gmra.mxu0 %v983
      %v1019 = vpop.f32.mrf.mxu0
      %v1020 = vadd.f32 %v970, %v1019
      %v1021 = vpop.f32.mrf.mxu0
      %v1022 = vpop.f32.mrf.mxu0
      %v1023 = vadd.f32 %v975, %v1022
      %v1024 = vpop.f32.mrf.mxu0
      %1025 = vdwg.mxu0
      %1026 = vst [vmem:[%s487] sm:$0xff] %v1020
      %1027 = vst [vmem:[%s487 + $0x8] sm:$0xf] %v1023
      %p1028 = scmp.lt.s32.totalorder %s25, 1
      %s1029 = scalar_select %p1028, %s25, 1
      %s1030 = smul.addr %s1029, 2
      %s1031 = smul.addr %s1030, 8
      %s1032 = scalar_lea.vmem %s14, %s1031
      // Predicated region
      $region77: #{tpu_custom_call.1} parent=75 // pred_check
        %p1033 = pneg %p347
      $region78: #{tpu_custom_call.1} parent=75 // pred_check_branch
        %1035 = sbr.rel (%p1033) target = $region80
      $region79: #{tpu_custom_call.1} parent=75 // pred_region
        _
      $region80: #{tpu_custom_call.1} parent=75 // pred_fallthru
        _
    $region76: #{tpu_custom_call.1} parent=5 // pred_fallthru
      _
    %p1036 = scmp.le.s32.totalorder 2, %s20
    // Predicated region
    $region81: #{tpu_custom_call.1} parent=5 // pred_check
      %p1037 = pneg %p1036
    $region82: #{tpu_custom_call.1} parent=5 // pred_check_branch
      %1039 = sbr.rel (%p1037) target = $region84
    $region83: #{tpu_custom_call.1} parent=5 // pred_region
      %s1040 = ssub.s32 %s20, 2
      // Predicated region
      $region85: #{tpu_custom_call.1} parent=83 // pred_check
        %p1041 = pneg %p353
      $region86: #{tpu_custom_call.1} parent=83 // pred_check_branch
        %1043 = sbr.rel (%p1041) target = $region88
      $region87: #{tpu_custom_call.1} parent=83 // pred_region
        %p1044 = scmp.lt.s32.totalorder %s26, 1
        %s1045 = scalar_select %p1044, %s26, 1
        %s1046 = smul.addr %s1045, 2
        %s1047 = smul.addr %s1046, 8
        %s1048 = scalar_lea.vmem %s14, %s1047
      $region88: #{tpu_custom_call.1} parent=83 // pred_fallthru
        _
    $region84: #{tpu_custom_call.1} parent=5 // pred_fallthru
      _
  $region6: #{tpu_custom_call.1} parent=0 // loop_footer
    %s24 = sadd.s32 1, %s20
  $region7: #{tpu_custom_call.1} parent=0 // loop_footer_branch
    %19 = sbr.rel target = $region3
  $region8: #{tpu_custom_call.1} parent=0 // loop_exit
    _

</llo_original>
